<compile_context>
chip_gen: v5e
topology: v5e:2x2
jax: 0.10.0
libtpu: 0.0.40
codegen_flags: <defaults>
</compile_context>

<pallas_src>
import jax
import jax.numpy as jnp
from jax.experimental import pallas as pl
from jax.experimental.pallas import tpu as pltpu

# --- dimensions implied by the module --------------------------------------
CIN, COUT = 3, 3
KH, KW = 3, 3
H, W = 4, 5                       # fc = Linear(3*4*5, 10)  =>  spatial is 4x5
FC_IN, FC_OUT = CIN * H * W, 10   # 60 -> 10
BN_EPS = 1e-5
TN_MAX = 1024                     # batch tile (multiple of 16; small enough for v7x VMEM)


def _round_up(x, m):
    return (x + m - 1) // m * m


# --- wrapper-side weight folding (no x involved) ----------------------------
def _fold_conv_bn(conv_w, conv_b, bn_gamma, bn_beta, bn_mean, bn_var):
    """Fold Conv2d(3x3, pad=1, stride=1) + bias + eval-mode BN into (A, c) with
       conv_bn_out_flat = x_flat @ A + c   (PyTorch NCHW .view flatten order)."""
    ih = jnp.arange(H)
    oh = jnp.arange(H)
    dh = ih[:, None] - oh[None, :] + 1                 # kh = ih - oh + 1
    vh = (dh >= 0) & (dh < KH)
    dhc = jnp.clip(dh, 0, KH - 1)
    iw = jnp.arange(W)
    ow = jnp.arange(W)
    dw = iw[:, None] - ow[None, :] + 1                 # kw = iw - ow + 1
    vw = (dw >= 0) & (dw < KW)
    dwc = jnp.clip(dw, 0, KW - 1)
    # wk[co, ci, ih, oh, iw, ow] = w[co, ci, ih-oh+1, iw-ow+1], masked to valid taps.
    wk = conv_w[:, :, dhc[:, :, None, None], dwc[None, None, :, :]]
    wk = jnp.where(vh[:, :, None, None] & vw[None, None, :, :], wk, 0.0)
    # rows: (ci, ih, iw) input flatten; cols: (co, oh, ow) output flatten.
    a_raw = jnp.transpose(wk, (1, 2, 4, 0, 3, 5)).reshape(FC_IN, FC_IN)

    scale = bn_gamma / jnp.sqrt(bn_var + BN_EPS)       # gamma / sqrt(var + eps)
    shift = bn_beta - bn_mean * scale
    a = a_raw * jnp.repeat(scale, H * W)[None, :]
    c = jnp.repeat(conv_b * scale + shift, H * W)      # (60,)
    return a, c


# --- Pallas kernel ----------------------------------------------------------
def _fused_kernel(x_ref, a_ref, c_ref, fcw_ref, fcb_ref, out_ref):
    # x_ref  : (TN, 60)  batch tile, MXU dtype (bf16 or f32)
    # a_ref  : (60, 60)  folded conv+BN matrix
    # c_ref  : (1, 60)   folded conv-bias + BN shift (f32)
    # fcw_ref: (60, 10)  fc weight (transposed)
    # fcb_ref: (1, 10)   fc bias (f32)
    # out_ref: (TN, 10)  f32 output tile
    h = jnp.dot(x_ref[...], a_ref[...], preferred_element_type=jnp.float32)
    h = jnp.maximum(h + c_ref[...], 0.0)               # bias + BN + ReLU in f32 (VPU)
    out_ref[...] = (
        jnp.dot(h.astype(fcw_ref.dtype), fcw_ref[...],
                preferred_element_type=jnp.float32)
        + fcb_ref[...]
    ).astype(out_ref.dtype)


# --- wrapper ----------------------------------------------------------------
def conv_bn_relu_fc(x, conv_w, conv_b, bn_gamma, bn_beta, bn_mean, bn_var,
                    fc_w, fc_b, *, mxu_dtype=jnp.bfloat16):
    n = x.shape[0]
    a, c = _fold_conv_bn(conv_w.astype(jnp.float32), conv_b.astype(jnp.float32),
                         bn_gamma.astype(jnp.float32), bn_beta.astype(jnp.float32),
                         bn_mean.astype(jnp.float32), bn_var.astype(jnp.float32))

    # batch tiling: lane-dense (TN, 60) layout, TN multiple of 16 (bf16 sublane pack)
    tn = min(TN_MAX, _round_up(n, 16))
    n_pad = _round_up(n, tn)
    x_flat = x.reshape(n, FC_IN).astype(mxu_dtype)
    if n_pad != n:
        x_flat = jnp.pad(x_flat, ((0, n_pad - n), (0, 0)))

    out = pl.pallas_call(
        _fused_kernel,
        out_shape=jax.ShapeDtypeStruct((n_pad, FC_OUT), jnp.float32),
        grid_spec=pltpu.PrefetchScalarGridSpec(
            num_scalar_prefetch=0,
            grid=(n_pad // tn,),
            in_specs=[
                pl.BlockSpec((tn, FC_IN), lambda i: (i, 0)),        # x tile (pipelined)
                pl.BlockSpec((FC_IN, FC_IN), lambda i: (0, 0)),     # A (resident)
                pl.BlockSpec((1, FC_IN), lambda i: (0, 0)),         # c
                pl.BlockSpec((FC_IN, FC_OUT), lambda i: (0, 0)),    # fc weight^T
                pl.BlockSpec((1, FC_OUT), lambda i: (0, 0)),        # fc bias
            ],
            out_specs=pl.BlockSpec((tn, FC_OUT), lambda i: (i, 0)),
        ),
        compiler_params=pltpu.CompilerParams(
            dimension_semantics=("parallel",)),
    )(
        x_flat,
        a.astype(mxu_dtype),
        c.reshape(1, FC_IN).astype(jnp.float32),
        fc_w.T.astype(mxu_dtype),
        fc_b.reshape(1, FC_OUT).astype(jnp.float32),
    )
    return out[:n]


# --- pure-JAX reference (for correctness check only) ------------------------
def _reference(x, conv_w, conv_b, bn_gamma, bn_beta, bn_mean, bn_var, fc_w, fc_b):
    y = jax.lax.conv_general_dilated(
        x, conv_w, window_strides=(1, 1), padding=((1, 1), (1, 1)),
        dimension_numbers=("NCHW", "OIHW", "NCHW"))
    y = y + conv_b[None, :, None, None]
    scale = bn_gamma / jnp.sqrt(bn_var + BN_EPS)
    y = (y - bn_mean[None, :, None, None]) * scale[None, :, None, None] \
        + bn_beta[None, :, None, None]
    y = jnp.maximum(y, 0.0)
    y = y.reshape(x.shape[0], -1)
    return y @ fc_w.T + fc_b


if __name__ == "__main__":
    key = jax.random.PRNGKey(0)
    kx, kw, kb, kf = jax.random.split(key, 4)

    N = 2
    x = jax.random.normal(kx, (N, CIN, H, W), jnp.float32)

    # deterministic parameter init (shapes per the module's __init__)
    fan_in, fan_out = CIN * KH * KW, COUT * KH * KW
    bound = (6.0 / (fan_in + fan_out)) ** 0.5          # xavier_uniform-style bound
    conv_w = jax.random.uniform(kw, (COUT, CIN, KH, KW), jnp.float32, -bound, bound)
    conv_b = jax.random.normal(kb, (COUT,), jnp.float32) * 0.1
    bn_gamma = jnp.ones((COUT,), jnp.float32)          # constant_(1)
    bn_beta = jnp.zeros((COUT,), jnp.float32)          # constant_(0)
    bn_mean = jnp.zeros((COUT,), jnp.float32)          # running stats (eval mode)
    bn_var = jnp.ones((COUT,), jnp.float32)
    fc_w = jax.random.normal(kf, (FC_OUT, FC_IN), jnp.float32) * 0.01  # normal_(0, 0.01)
    fc_b = jnp.zeros((FC_OUT,), jnp.float32)           # zero_()

    ref = _reference(x, conv_w, conv_b, bn_gamma, bn_beta, bn_mean, bn_var,
                     fc_w, fc_b)

    # exact-path check (f32 MXU operands): tight tolerance
    out_f32 = conv_bn_relu_fc(x, conv_w, conv_b, bn_gamma, bn_beta, bn_mean, bn_var,
                              fc_w, fc_b, mxu_dtype=jnp.float32)
    out_f32 = jax.block_until_ready(out_f32)
    assert out_f32.shape == (N, FC_OUT)
    assert jnp.allclose(out_f32, ref, atol=1e-4, rtol=1e-4), "f32 mismatch vs reference"

    # performance path (bf16 MXU operands, f32 accumulation): relaxed tolerance
    out_bf16 = conv_bn_relu_fc(x, conv_w, conv_b, bn_gamma, bn_beta, bn_mean, bn_var,
                               fc_w, fc_b, mxu_dtype=jnp.bfloat16)
    out_bf16 = jax.block_until_ready(out_bf16)
    assert out_bf16.shape == (N, FC_OUT)
    assert jnp.allclose(out_bf16, ref, atol=2e-2, rtol=2e-2), "bf16 mismatch vs reference"

    print("KERNEL_OK")
</pallas_src>

<mosaic_0001>
module attributes {stable_mosaic.version = 11 : i64} {
  func.func @_fused_kernel(%arg0: i32, %arg1: memref<16x60xf32, #tpu.memory_space<vmem>>, %arg2: memref<60x60xf32, #tpu.memory_space<vmem>>, %arg3: memref<1x60xf32, #tpu.memory_space<vmem>>, %arg4: memref<60x10xf32, #tpu.memory_space<vmem>>, %arg5: memref<1x10xf32, #tpu.memory_space<vmem>>, %arg6: memref<16x10xf32, #tpu.memory_space<vmem>>) attributes {dimension_semantics = [#tpu.dimension_semantics<parallel>], iteration_bounds = array<i64: 1>, scalar_prefetch = 0 : i64, scratch_operands = 0 : i64, tpu.core_type = #tpu.core_type<tc>, window_params = [{transform_indices = @transform_0, window_bounds = array<i64: 16, 60>}, {pipeline_mode = #tpu.pipeline_mode<synchronous>, transform_indices = @transform_1, window_bounds = array<i64: 60, 60>}, {pipeline_mode = #tpu.pipeline_mode<synchronous>, transform_indices = @transform_2, window_bounds = array<i64: 1, 60>}, {pipeline_mode = #tpu.pipeline_mode<synchronous>, transform_indices = @transform_3, window_bounds = array<i64: 60, 10>}, {pipeline_mode = #tpu.pipeline_mode<synchronous>, transform_indices = @transform_4, window_bounds = array<i64: 1, 10>}, {transform_indices = @transform_5, window_bounds = array<i64: 16, 10>}]} {
    %c0 = arith.constant 0 : index
    %c0_0 = arith.constant 0 : index
    %0 = vector.load %arg1[%c0, %c0_0] : memref<16x60xf32, #tpu.memory_space<vmem>>, vector<16x60xf32>
    %c0_1 = arith.constant 0 : index
    %c0_2 = arith.constant 0 : index
    %1 = vector.load %arg2[%c0_1, %c0_2] : memref<60x60xf32, #tpu.memory_space<vmem>>, vector<60x60xf32>
    %cst = arith.constant dense<0.000000e+00> : vector<16x60xf32>
    %2 = tpu.matmul %0, %1, %cst {dimension_numbers = #tpu.dot_dimension_numbers<[1], [0], [0], [1], [0, 0, 1, 1], [], []>} : vector<16x60xf32>, vector<60x60xf32>, vector<16x60xf32> -> vector<16x60xf32>
    %c0_3 = arith.constant 0 : index
    %c0_4 = arith.constant 0 : index
    %3 = vector.load %arg3[%c0_3, %c0_4] : memref<1x60xf32, #tpu.memory_space<vmem>>, vector<1x60xf32>
    %4 = vector.broadcast %3 : vector<1x60xf32> to vector<16x60xf32>
    %5 = arith.addf %2, %4 : vector<16x60xf32>
    %cst_5 = arith.constant 0.000000e+00 : f32
    %6 = vector.broadcast %cst_5 : f32 to vector<16x60xf32>
    %7 = arith.maximumf %5, %6 : vector<16x60xf32>
    %c0_6 = arith.constant 0 : index
    %c0_7 = arith.constant 0 : index
    %8 = vector.load %arg4[%c0_6, %c0_7] : memref<60x10xf32, #tpu.memory_space<vmem>>, vector<60x10xf32>
    %cst_8 = arith.constant dense<0.000000e+00> : vector<16x10xf32>
    %9 = tpu.matmul %7, %8, %cst_8 {dimension_numbers = #tpu.dot_dimension_numbers<[1], [0], [0], [1], [0, 0, 1, 1], [], []>} : vector<16x60xf32>, vector<60x10xf32>, vector<16x10xf32> -> vector<16x10xf32>
    %c0_9 = arith.constant 0 : index
    %c0_10 = arith.constant 0 : index
    %10 = vector.load %arg5[%c0_9, %c0_10] : memref<1x10xf32, #tpu.memory_space<vmem>>, vector<1x10xf32>
    %11 = vector.broadcast %10 : vector<1x10xf32> to vector<16x10xf32>
    %12 = arith.addf %9, %11 : vector<16x10xf32>
    %c0_11 = arith.constant 0 : index
    %c0_12 = arith.constant 0 : index
    %13 = vector.load %arg6[%c0_11, %c0_12] : memref<16x10xf32, #tpu.memory_space<vmem>>, vector<16x10xf32>
    tpu.vector_store %arg6[%c0_11, %c0_12], %12 {strides = array<i32>} : memref<16x10xf32, #tpu.memory_space<vmem>>, vector<16x10xf32>,
    return
  }
  func.func @transform_0(%arg0: i32) -> (i32, i32) {
    %c0_i32 = arith.constant 0 : i32
    %c0_i32_0 = arith.constant 0 : i32
    return %arg0, %c0_i32 : i32, i32
  }
  func.func @transform_1(%arg0: i32) -> (i32, i32) {
    %c0_i32 = arith.constant 0 : i32
    %c0_i32_0 = arith.constant 0 : i32
    %c0_i32_1 = arith.constant 0 : i32
    return %c0_i32, %c0_i32_0 : i32, i32
  }
  func.func @transform_2(%arg0: i32) -> (i32, i32) {
    %c0_i32 = arith.constant 0 : i32
    %c0_i32_0 = arith.constant 0 : i32
    %c0_i32_1 = arith.constant 0 : i32
    return %c0_i32, %c0_i32_0 : i32, i32
  }
  func.func @transform_3(%arg0: i32) -> (i32, i32) {
    %c0_i32 = arith.constant 0 : i32
    %c0_i32_0 = arith.constant 0 : i32
    %c0_i32_1 = arith.constant 0 : i32
    return %c0_i32, %c0_i32_0 : i32, i32
  }
  func.func @transform_4(%arg0: i32) -> (i32, i32) {
    %c0_i32 = arith.constant 0 : i32
    %c0_i32_0 = arith.constant 0 : i32
    %c0_i32_1 = arith.constant 0 : i32
    return %c0_i32, %c0_i32_0 : i32, i32
  }
  func.func @transform_5(%arg0: i32) -> (i32, i32) {
    %c0_i32 = arith.constant 0 : i32
    %c0_i32_0 = arith.constant 0 : i32
    return %arg0, %c0_i32 : i32, i32
  }
}

</mosaic_0001>

<llo_original>
// kernel: tpu_custom_call.1
$region0: #{tpu_custom_call.1}
  #allocation0 [shape = 'u32[]', space=smem, size = 0x4, offset = 0x4, fixed_abs, tag = 'smem constant byte address 0x4 - core index']
  #allocation1 [shape = 'u32[72,128]{1,0:T(1,128)}', space=vmem, size = 0x9000, scoped, tag = 'internal scratch']
  %s0 = inlined_call_operand.vmem [shape: f32[16,60], index: 0, kind: input, shape index: {}]
  %s1 = inlined_call_operand.vmem [shape: f32[60,60], index: 1, kind: input, shape index: {}]
  %s2 = inlined_call_operand.vmem [shape: f32[1,60], index: 2, kind: input, shape index: {}]
  %s3 = inlined_call_operand.vmem [shape: f32[60,10], index: 3, kind: input, shape index: {}]
  %s4 = inlined_call_operand.vmem [shape: f32[1,10], index: 4, kind: input, shape index: {}]
  %s5 = inlined_call_operand.hbm [shape: f32[16,10], index: 5, kind: output, shape index: {}]
  %s6 = sld [smem:[#allocation0]]
  $region30: #{tpu_custom_call.1} parent=0
    _
  %s8 = ssub.s32 1, %s6
  %s9 = scalar_select 0, %s8, %s6
  $region1: #{tpu_custom_call.1} parent=0
    #allocation2 [shape = 'u8[8192]{0}', space=vmem, size = 0x2000, scoped, tag = 'output window, operand 0, single buffered']
    #allocation3 [shape = 's32[1]{0}', space=sflag, size = 0x4, scoped, tag = 'scoped memory for tpu_custom_call.1']
    %10 = vsyncpa [#allocation3], 0
    // Predicated region
    $region2: #{tpu_custom_call.1} parent=1 // pred_check
      _
    $region3: #{tpu_custom_call.1} parent=1 // pred_check_branch
      %12 = sbr.rel (0) target = $region5
    $region4: #{tpu_custom_call.1} parent=1 // pred_region
      _
    $region5: #{tpu_custom_call.1} parent=1 // pred_fallthru
      _
    // Predicated region
    $region6: #{tpu_custom_call.1} parent=1 // pred_check
      _
    $region7: #{tpu_custom_call.1} parent=1 // pred_check_branch
      %14 = sbr.rel (0) target = $region9
    $region8: #{tpu_custom_call.1} parent=1 // pred_region
      _
    $region9: #{tpu_custom_call.1} parent=1 // pred_fallthru
      _
    // Predicated region
    $region10: #{tpu_custom_call.1} parent=1 // pred_check
      _
    $region11: #{tpu_custom_call.1} parent=1 // pred_check_branch
      %16 = sbr.rel (0) target = $region13
    $region12: #{tpu_custom_call.1} parent=1 // pred_region
      _
    $region13: #{tpu_custom_call.1} parent=1 // pred_fallthru
      _
    // Predicated region
    $region14: #{tpu_custom_call.1} parent=1 // pred_check
      _
    $region15: #{tpu_custom_call.1} parent=1 // pred_check_branch
      %18 = sbr.rel (0) target = $region17
    $region16: #{tpu_custom_call.1} parent=1 // pred_region
      _
    $region17: #{tpu_custom_call.1} parent=1 // pred_fallthru
      _
    // Predicated region
    $region18: #{tpu_custom_call.1} parent=1 // pred_check
      _
    $region19: #{tpu_custom_call.1} parent=1 // pred_check_branch
      %20 = sbr.rel (0) target = $region21
    $region20: #{tpu_custom_call.1} parent=1 // pred_region
      _
    $region21: #{tpu_custom_call.1} parent=1 // pred_fallthru
      _
    %v21 = vld [vmem:[%s0] sm:$0xff]
    %v22 = vld [vmem:[%s0 + $0x8] sm:$0xff]
    %v23 = vld [vmem:[%s1] sm:$0xff]
    %v24 = vld [vmem:[%s1 + $0x8] sm:$0xff]
    %v25 = vld [vmem:[%s1 + $0x10] sm:$0xff]
    %v26 = vld [vmem:[%s1 + $0x18] sm:$0xff]
    %v27 = vld [vmem:[%s1 + $0x20] sm:$0xff]
    %v28 = vld [vmem:[%s1 + $0x28] sm:$0xff]
    %v29 = vld [vmem:[%s1 + $0x30] sm:$0xff]
    %v30 = vld [vmem:[%s1 + $0x38] sm:$0xf]
    %v31 = vld [vmem:[%s2] sm:$0x1]
    %v33 = vperm.slane %v31, 0
    %vm35 = vcmask 490496
    %v37 = vsel %vm35, %v21, 0
    %v40 = vsel %vm35, %v22, 0
    %vm42 = vcmask 1043456
    %v44 = vsel %vm42, %v30, 0
    %46 = vmatpush.msra.mxu0 0.0
    %47 = vmatpush.msra.mxu0 0.0
    %48 = vmatpush.msra.mxu0 0.0
    %49 = vmatpush.msra.mxu0 0.0
    %50 = vmatpush.msra.mxu0 0.0
    %51 = vmatpush.msra.mxu0 0.0
    %52 = vmatpush.msra.mxu0 0.0
    %53 = vmatpush.msra.mxu0 0.0
    %54 = vmatpush.msra.mxu0 %v44
    %55 = vmatpush.msra.mxu0 %v29
    %56 = vmatpush.msra.mxu0 %v28
    %57 = vmatpush.msra.mxu0 %v27
    %58 = vmatpush.msra.mxu0 %v26
    %59 = vmatpush.msra.mxu0 %v25
    %60 = vmatpush.msra.mxu0 %v24
    %61 = vmatpush.msra.mxu0 %v23
    %62 = vmatmul.f32.gmra.mxu0 %v37
    %v63 = vpop.f32.mrf.mxu0
    %v64 = vadd.f32 %v33, %v63
    %65 = vmatmul.f32.gmra.mxu0 %v40
    %v66 = vpop.f32.mrf.mxu0
    %v67 = vadd.f32 %v33, %v66
    %68 = vdwg.mxu0
    %v69 = vmax.f32 %v64, 0.0
    %v70 = vmax.f32 %v67, 0.0
    %v71 = vld [vmem:[%s3] sm:$0xff]
    %v72 = vld [vmem:[%s3 + $0x8] sm:$0xff]
    %v73 = vld [vmem:[%s3 + $0x10] sm:$0xff]
    %v74 = vld [vmem:[%s3 + $0x18] sm:$0xff]
    %v75 = vld [vmem:[%s3 + $0x20] sm:$0xff]
    %v76 = vld [vmem:[%s3 + $0x28] sm:$0xff]
    %v77 = vld [vmem:[%s3 + $0x30] sm:$0xff]
    %v78 = vld [vmem:[%s3 + $0x38] sm:$0xf]
    %v79 = vld [vmem:[%s4] sm:$0x1]
    %v81 = vperm.slane %v79, 0
    %v84 = vsel %vm35, %v69, 0
    %v87 = vsel %vm35, %v70, 0
    %v90 = vsel %vm42, %v78, 0
    %92 = vmatpush.msra.mxu0 0.0
    %93 = vmatpush.msra.mxu0 0.0
    %94 = vmatpush.msra.mxu0 0.0
    %95 = vmatpush.msra.mxu0 0.0
    %96 = vmatpush.msra.mxu0 0.0
    %97 = vmatpush.msra.mxu0 0.0
    %98 = vmatpush.msra.mxu0 0.0
    %99 = vmatpush.msra.mxu0 0.0
    %100 = vmatpush.msra.mxu0 %v90
    %101 = vmatpush.msra.mxu0 %v77
    %102 = vmatpush.msra.mxu0 %v76
    %103 = vmatpush.msra.mxu0 %v75
    %104 = vmatpush.msra.mxu0 %v74
    %105 = vmatpush.msra.mxu0 %v73
    %106 = vmatpush.msra.mxu0 %v72
    %107 = vmatpush.msra.mxu0 %v71
    %108 = vmatmul.f32.gmra.mxu0 %v84
    %v109 = vpop.f32.mrf.mxu0
    %v110 = vadd.f32 %v81, %v109
    %111 = vmatmul.f32.gmra.mxu0 %v87
    %v112 = vpop.f32.mrf.mxu0
    %v113 = vadd.f32 %v81, %v112
    %114 = vdwg.mxu0
    %vm115 = vcmask 80896
    %116 = vst.msk [vmem:[#allocation2] sm:$0xff] %vm115, %v110
    %117 = vst.msk [vmem:[#allocation2 + $0x8] sm:$0xff] %vm115, %v113
    // Predicated region
    $region22: #{tpu_custom_call.1} parent=1 // pred_check
      _
    $region23: #{tpu_custom_call.1} parent=1 // pred_check_branch
      %119 = sbr.rel (0) target = $region25
    $region24: #{tpu_custom_call.1} parent=1 // pred_region
      %121 = vsyncadd [#allocation3], 0
      %s122 = sshll.u32 [#allocation2], 4
      %s123 = int_to_ptr.vmem [resolvable:$true] %s122
      %s124 = sshll.u32 %s5, 4
      %s125 = int_to_ptr.hbm [resolvable:$true] %s124
      %130 = dma.vmem_to_hbm [thread:$0]  %s123, 256, %s125, [#allocation3], 128, 128, 8
    $region25: #{tpu_custom_call.1} parent=1 // pred_fallthru
      _
    // Predicated region
    $region26: #{tpu_custom_call.1} parent=1 // pred_check
      _
    $region27: #{tpu_custom_call.1} parent=1 // pred_check_branch
      %132 = sbr.rel (0) target = $region29
    $region28: #{tpu_custom_call.1} parent=1 // pred_region
      %134 = dma.done [#allocation3], 256
    $region29: #{tpu_custom_call.1} parent=1 // pred_fallthru
      _
    %135 = vsyncpa [#allocation3], 1

</llo_original>
